<compile_context>
chip_gen: v7x
topology: tpu7x:2x2x1
jax: 0.10.0
libtpu: 0.0.40
codegen_flags: <defaults>
</compile_context>

<pallas_src>
import jax
import jax.numpy as jnp
from jax.experimental import pallas as pl
from jax.experimental.pallas import tpu as pltpu


# ---------------------------------------------------------------------------
# Fused Pallas kernel: conv1+BN -> ReLU -> conv2+BN -> +skip -> ReLU
# One grid step == one image.
# ---------------------------------------------------------------------------
def _resblock_kernel(xcat_ref, w1_ref, b1_ref, w2_ref, b2_ref, out_ref, yr_ref):
    # xcat_ref: (1, H, 3*W*Cin)  bf16  h-im2col of the zero-padded input
    # w1_ref  : (3*W*Cin, W*Cout) bf16 banded conv1 weights (BN scale folded)
    # b1_ref  : (1, W*Cout)       f32  conv1 bias + BN shift, tiled over w
    # w2_ref  : (3*W*Cout, W*Cout) bf16, b2_ref: (1, W*Cout) f32  (conv2)
    # out_ref : (1, H, W*Cout)    f32  final output (lane-dense, 128 wide)
    # yr_ref  : (H+2, W*Cout)     f32  scratch: h-padded ReLU(conv1) activations
    h = out_ref.shape[1]
    wcout = out_ref.shape[2]

    # ---- conv1 + folded BN: ONE MXU dot (K = 3*W*Cin) -----------------------
    y1 = jnp.dot(xcat_ref[0], w1_ref[...],
                 preferred_element_type=jnp.float32) + b1_ref[...]
    r1 = jnp.maximum(y1, 0.0)          # y1 is also the skip (= BN(conv1(x)))

    # ---- stash ReLU activations; zero ONLY the two halo rows ----------------
    yr_ref[0:1, :] = jnp.zeros((1, wcout), jnp.float32)
    yr_ref[h + 1:h + 2, :] = jnp.zeros((1, wcout), jnp.float32)
    yr_ref[1:h + 1, :] = r1

    # ---- conv2 + folded BN: ONE MXU dot (K = 3*W*Cout) -----------------------
    # Three contiguous row-windows of the scratch, concatenated on the lane
    # axis (each piece is exactly one 128-lane tile -> cheap concat).
    lhs2 = jnp.concatenate(
        [yr_ref[0:h, :], yr_ref[1:h + 1, :], yr_ref[2:h + 2, :]],
        axis=1).astype(jnp.bfloat16)
    y2 = jnp.dot(lhs2, w2_ref[...],
                 preferred_element_type=jnp.float32) + b2_ref[...]

    # ---- residual add + final ReLU ------------------------------------------
    out_ref[0] = jnp.maximum(y2 + y1, 0.0)


# ---------------------------------------------------------------------------
# One-time parameter preparation (band matrices + folded BN), done OUTSIDE the
# per-forward jit so the forward only DMAs already-materialized weights.
# ---------------------------------------------------------------------------
def _band_weights(w_oihw, scale, width):
    """PyTorch conv weight (Cout, Cin, 3, 3) -> (3, width*Cin, width*Cout)
    banded matrices with BN scale folded in and the zero-padding along w folded
    into the band structure (exact 0/1 selection, no matmul rounding)."""
    cout, cin, kh, kw = w_oihw.shape
    wf = jnp.transpose(w_oihw, (2, 3, 1, 0)) * scale          # (kh, kw, ci, co)
    # S[dw, p, w] = 1 iff p == w + dw - 1 (valid input column for output w)
    s = jnp.stack([jnp.eye(width, width, 1 - dw, dtype=wf.dtype)
                   for dw in range(kw)])                       # (kw, W, W)
    band = (s[None, :, :, None, :, None] *
            wf[:, :, None, :, None, :]).sum(axis=1)            # (kh, p, ci, w, co)
    return band.reshape(kh, width * cin, width * cout)


def prepare_resblock_params(params, width):
    """Fold eval-mode BN into both convs and build the concatenated-K band
    weights (bf16) + lane-tiled biases (f32). Call once per parameter set."""
    eps = 1e-5
    scale = params["gamma"] * jax.lax.rsqrt(params["var"] + eps)
    shift = params["beta"] - params["mean"] * scale
    cout = params["w1"].shape[0]

    w1b = _band_weights(params["w1"], scale, width)            # (3, W*Cin,  W*Cout)
    w2b = _band_weights(params["w2"], scale, width)            # (3, W*Cout, W*Cout)
    return {
        "w1cat": w1b.reshape(-1, width * cout).astype(jnp.bfloat16),
        "w2cat": w2b.reshape(-1, width * cout).astype(jnp.bfloat16),
        "b1": jnp.tile(params["b1"] * scale + shift, width).reshape(1, width * cout),
        "b2": jnp.tile(params["b2"] * scale + shift, width).reshape(1, width * cout),
    }


# ---------------------------------------------------------------------------
# Forward pass (tiny XLA glue + one fused pallas_call)
# ---------------------------------------------------------------------------
@jax.jit
def basic_resblock_forward(x_nchw, prep):
    n, cin, h, w = x_nchw.shape
    wcout = prep["b1"].shape[1]
    cout = wcout // w

    # NCHW -> (N, H, W*Cin), zero-pad h, then h-only im2col: concatenate the 3
    # h-shifted slabs along the contraction axis so each conv is ONE MXU dot.
    x_rows = jnp.transpose(x_nchw, (0, 2, 3, 1)).reshape(n, h, w * cin)
    xp = jnp.pad(x_rows, ((0, 0), (1, 1), (0, 0)))             # (N, H+2, W*Cin)
    xcat = jnp.concatenate([xp[:, 0:h], xp[:, 1:h + 1], xp[:, 2:h + 2]],
                           axis=-1).astype(jnp.bfloat16)       # (N, H, 3*W*Cin)

    kcat1 = xcat.shape[-1]             # 3*W*Cin
    kcat2 = prep["w2cat"].shape[0]     # 3*W*Cout

    out3d = pl.pallas_call(
        _resblock_kernel,
        out_shape=jax.ShapeDtypeStruct((n, h, wcout), jnp.float32),
        grid=(n,),
        in_specs=[
            pl.BlockSpec((1, h, kcat1), lambda i: (i, 0, 0)),     # per-image input
            pl.BlockSpec((kcat1, wcout), lambda i: (0, 0)),       # conv1 weights
            pl.BlockSpec((1, wcout), lambda i: (0, 0)),           # conv1 bias
            pl.BlockSpec((kcat2, wcout), lambda i: (0, 0)),       # conv2 weights
            pl.BlockSpec((1, wcout), lambda i: (0, 0)),           # conv2 bias
        ],
        out_specs=pl.BlockSpec((1, h, wcout), lambda i: (i, 0, 0)),
        scratch_shapes=[pltpu.VMEM((h + 2, wcout), jnp.float32)],
        compiler_params=pltpu.CompilerParams(
            dimension_semantics=("parallel",)),
    )(xcat, prep["w1cat"], prep["b1"], prep["w2cat"], prep["b2"])

    return jnp.transpose(out3d.reshape(n, h, w, cout), (0, 3, 1, 2))


# ---------------------------------------------------------------------------
# Pure-JAX f32 reference (independent of the band-matrix construction)
# ---------------------------------------------------------------------------
def _reference(x_nchw, params):
    eps = 1e-5
    scale = params["gamma"] / jnp.sqrt(params["var"] + eps)
    shift = params["beta"] - params["mean"] * scale

    def conv(x, wgt, bias):
        y = jax.lax.conv_general_dilated(
            x, wgt, window_strides=(1, 1), padding=((1, 1), (1, 1)),
            dimension_numbers=("NCHW", "OIHW", "NCHW"),
            precision=jax.lax.Precision.HIGHEST)
        return y + bias[None, :, None, None]

    def bn(y):
        return y * scale[None, :, None, None] + shift[None, :, None, None]

    y1 = bn(conv(x_nchw, params["w1"], params["b1"]))
    r1 = jnp.maximum(y1, 0.0)
    y2 = bn(conv(r1, params["w2"], params["b2"]))
    skip = y1                          # change_size=True -> skip = BN(conv1(x))
    return jnp.maximum(y2 + skip, 0.0)


# ---------------------------------------------------------------------------
if __name__ == "__main__":
    key = jax.random.PRNGKey(0)
    keys = jax.random.split(key, 9)

    N, Cin, H, W = 2, 4, 16, 16
    Cout, K = 8, 3

    x = jax.random.normal(keys[0], (N, Cin, H, W), jnp.float32)

    params = {
        "w1": 0.1 * jax.random.normal(keys[1], (Cout, Cin, K, K), jnp.float32),
        "b1": 0.1 * jax.random.normal(keys[2], (Cout,), jnp.float32),
        "w2": 0.1 * jax.random.normal(keys[3], (Cout, Cout, K, K), jnp.float32),
        "b2": 0.1 * jax.random.normal(keys[4], (Cout,), jnp.float32),
        "gamma": 1.0 + 0.1 * jax.random.normal(keys[5], (Cout,), jnp.float32),
        "beta": 0.1 * jax.random.normal(keys[6], (Cout,), jnp.float32),
        "mean": 0.1 * jax.random.normal(keys[7], (Cout,), jnp.float32),
        "var": 0.5 + jnp.abs(jax.random.normal(keys[8], (Cout,), jnp.float32)),
    }

    prep = prepare_resblock_params(params, W)      # one-time, outside the jit
    out = basic_resblock_forward(x, prep)
    out = jax.block_until_ready(out)

    ref = _reference(x, params)
    assert out.shape == (N, Cout, H, W)
    err = float(jnp.max(jnp.abs(out - ref)))
    # bf16 MXU operands (f32 accumulation) => tolerance loosened vs. pure f32.
    assert jnp.allclose(out, ref, atol=2e-2, rtol=2e-2), f"max abs err {err}"

    print("KERNEL_OK")
</pallas_src>

<mosaic_0001>
module attributes {stable_mosaic.version = 11 : i64} {
  func.func @_resblock_kernel(%arg0: i32, %arg1: memref<1x16x192xbf16, #tpu.memory_space<vmem>>, %arg2: memref<192x128xbf16, #tpu.memory_space<vmem>>, %arg3: memref<1x128xf32, #tpu.memory_space<vmem>>, %arg4: memref<384x128xbf16, #tpu.memory_space<vmem>>, %arg5: memref<1x128xf32, #tpu.memory_space<vmem>>, %arg6: memref<1x16x128xf32, #tpu.memory_space<vmem>>, %arg7: memref<18x128xf32, #tpu.memory_space<vmem>>) attributes {dimension_semantics = [#tpu.dimension_semantics<parallel>], iteration_bounds = array<i64: 2>, scalar_prefetch = 0 : i64, scratch_operands = 1 : i64, tpu.core_type = #tpu.core_type<tc>, window_params = [{transform_indices = @transform_0, window_bounds = array<i64: 1, 16, 192>}, {pipeline_mode = #tpu.pipeline_mode<synchronous>, transform_indices = @transform_1, window_bounds = array<i64: 192, 128>}, {pipeline_mode = #tpu.pipeline_mode<synchronous>, transform_indices = @transform_2, window_bounds = array<i64: 1, 128>}, {pipeline_mode = #tpu.pipeline_mode<synchronous>, transform_indices = @transform_3, window_bounds = array<i64: 384, 128>}, {pipeline_mode = #tpu.pipeline_mode<synchronous>, transform_indices = @transform_4, window_bounds = array<i64: 1, 128>}, {transform_indices = @transform_5, window_bounds = array<i64: 1, 16, 128>}]} {
    %c0 = arith.constant 0 : index
    %c0_0 = arith.constant 0 : index
    %c0_1 = arith.constant 0 : index
    %0 = vector.load %arg1[%c0, %c0_0, %c0_1] : memref<1x16x192xbf16, #tpu.memory_space<vmem>>, vector<1x16x192xbf16>
    %1 = vector.shape_cast %0 : vector<1x16x192xbf16> to vector<16x192xbf16>
    %c0_2 = arith.constant 0 : index
    %c0_3 = arith.constant 0 : index
    %2 = vector.load %arg2[%c0_2, %c0_3] : memref<192x128xbf16, #tpu.memory_space<vmem>>, vector<192x128xbf16>
    %cst = arith.constant dense<0.000000e+00> : vector<16x128xf32>
    %3 = tpu.matmul %1, %2, %cst {dimension_numbers = #tpu.dot_dimension_numbers<[1], [0], [0], [1], [0, 0, 1, 1], [], []>} : vector<16x192xbf16>, vector<192x128xbf16>, vector<16x128xf32> -> vector<16x128xf32>
    %c0_4 = arith.constant 0 : index
    %c0_5 = arith.constant 0 : index
    %4 = vector.load %arg3[%c0_4, %c0_5] : memref<1x128xf32, #tpu.memory_space<vmem>>, vector<1x128xf32>
    %5 = vector.broadcast %4 : vector<1x128xf32> to vector<16x128xf32>
    %6 = arith.addf %3, %5 : vector<16x128xf32>
    %cst_6 = arith.constant 0.000000e+00 : f32
    %7 = vector.broadcast %cst_6 : f32 to vector<16x128xf32>
    %8 = arith.maximumf %6, %7 : vector<16x128xf32>
    %cst_7 = arith.constant 0.000000e+00 : f32
    %9 = vector.broadcast %cst_7 : f32 to vector<1x128xf32>
    %c0_8 = arith.constant 0 : index
    %c0_9 = arith.constant 0 : index
    %10 = vector.load %arg7[%c0_8, %c0_9] : memref<18x128xf32, #tpu.memory_space<vmem>>, vector<1x128xf32>
    tpu.vector_store %arg7[%c0_8, %c0_9], %9 {strides = array<i32>} : memref<18x128xf32, #tpu.memory_space<vmem>>, vector<1x128xf32>,
    %cst_10 = arith.constant 0.000000e+00 : f32
    %11 = vector.broadcast %cst_10 : f32 to vector<1x128xf32>
    %c17 = arith.constant 17 : index
    %c0_11 = arith.constant 0 : index
    %12 = vector.load %arg7[%c17, %c0_11] : memref<18x128xf32, #tpu.memory_space<vmem>>, vector<1x128xf32>
    tpu.vector_store %arg7[%c17, %c0_11], %11 {strides = array<i32>} : memref<18x128xf32, #tpu.memory_space<vmem>>, vector<1x128xf32>,
    %c1 = arith.constant 1 : index
    %c0_12 = arith.constant 0 : index
    %13 = vector.load %arg7[%c1, %c0_12] : memref<18x128xf32, #tpu.memory_space<vmem>>, vector<16x128xf32>
    tpu.vector_store %arg7[%c1, %c0_12], %8 {strides = array<i32>} : memref<18x128xf32, #tpu.memory_space<vmem>>, vector<16x128xf32>,
    %c0_13 = arith.constant 0 : index
    %c0_14 = arith.constant 0 : index
    %14 = vector.load %arg7[%c0_13, %c0_14] : memref<18x128xf32, #tpu.memory_space<vmem>>, vector<16x128xf32>
    %c1_15 = arith.constant 1 : index
    %c0_16 = arith.constant 0 : index
    %15 = vector.load %arg7[%c1_15, %c0_16] : memref<18x128xf32, #tpu.memory_space<vmem>>, vector<16x128xf32>
    %c2 = arith.constant 2 : index
    %c0_17 = arith.constant 0 : index
    %16 = vector.load %arg7[%c2, %c0_17] : memref<18x128xf32, #tpu.memory_space<vmem>>, vector<16x128xf32>
    %17 = tpu.concatenate %14, %15, %16 in 1 : vector<16x128xf32>, vector<16x128xf32>, vector<16x128xf32> -> vector<16x384xf32>
    %18 = arith.truncf %17 : vector<16x384xf32> to vector<16x384xbf16>
    %c0_18 = arith.constant 0 : index
    %c0_19 = arith.constant 0 : index
    %19 = vector.load %arg4[%c0_18, %c0_19] : memref<384x128xbf16, #tpu.memory_space<vmem>>, vector<384x128xbf16>
    %cst_20 = arith.constant dense<0.000000e+00> : vector<16x128xf32>
    %20 = tpu.matmul %18, %19, %cst_20 {dimension_numbers = #tpu.dot_dimension_numbers<[1], [0], [0], [1], [0, 0, 1, 1], [], []>} : vector<16x384xbf16>, vector<384x128xbf16>, vector<16x128xf32> -> vector<16x128xf32>
    %c0_21 = arith.constant 0 : index
    %c0_22 = arith.constant 0 : index
    %21 = vector.load %arg5[%c0_21, %c0_22] : memref<1x128xf32, #tpu.memory_space<vmem>>, vector<1x128xf32>
    %22 = vector.broadcast %21 : vector<1x128xf32> to vector<16x128xf32>
    %23 = arith.addf %20, %22 : vector<16x128xf32>
    %24 = arith.addf %23, %6 : vector<16x128xf32>
    %cst_23 = arith.constant 0.000000e+00 : f32
    %25 = vector.broadcast %cst_23 : f32 to vector<16x128xf32>
    %26 = arith.maximumf %24, %25 : vector<16x128xf32>
    %c0_24 = arith.constant 0 : index
    %c0_25 = arith.constant 0 : index
    %c0_26 = arith.constant 0 : index
    %27 = vector.load %arg6[%c0_24, %c0_25, %c0_26] : memref<1x16x128xf32, #tpu.memory_space<vmem>>, vector<1x16x128xf32>
    %28 = vector.shape_cast %27 : vector<1x16x128xf32> to vector<16x128xf32>
    %29 = vector.shape_cast %26 : vector<16x128xf32> to vector<1x16x128xf32>
    tpu.vector_store %arg6[%c0_24, %c0_25, %c0_26], %29 {strides = array<i32>} : memref<1x16x128xf32, #tpu.memory_space<vmem>>, vector<1x16x128xf32>,
    return
  }
  func.func @transform_0(%arg0: i32) -> (i32, i32, i32) {
    %c0_i32 = arith.constant 0 : i32
    %c0_i32_0 = arith.constant 0 : i32
    %c0_i32_1 = arith.constant 0 : i32
    return %arg0, %c0_i32, %c0_i32_0 : i32, i32, i32
  }
  func.func @transform_1(%arg0: i32) -> (i32, i32) {
    %c0_i32 = arith.constant 0 : i32
    %c0_i32_0 = arith.constant 0 : i32
    %c0_i32_1 = arith.constant 0 : i32
    return %c0_i32, %c0_i32_0 : i32, i32
  }
  func.func @transform_2(%arg0: i32) -> (i32, i32) {
    %c0_i32 = arith.constant 0 : i32
    %c0_i32_0 = arith.constant 0 : i32
    %c0_i32_1 = arith.constant 0 : i32
    return %c0_i32, %c0_i32_0 : i32, i32
  }
  func.func @transform_3(%arg0: i32) -> (i32, i32) {
    %c0_i32 = arith.constant 0 : i32
    %c0_i32_0 = arith.constant 0 : i32
    %c0_i32_1 = arith.constant 0 : i32
    return %c0_i32, %c0_i32_0 : i32, i32
  }
  func.func @transform_4(%arg0: i32) -> (i32, i32) {
    %c0_i32 = arith.constant 0 : i32
    %c0_i32_0 = arith.constant 0 : i32
    %c0_i32_1 = arith.constant 0 : i32
    return %c0_i32, %c0_i32_0 : i32, i32
  }
  func.func @transform_5(%arg0: i32) -> (i32, i32, i32) {
    %c0_i32 = arith.constant 0 : i32
    %c0_i32_0 = arith.constant 0 : i32
    %c0_i32_1 = arith.constant 0 : i32
    return %arg0, %c0_i32, %c0_i32_0 : i32, i32, i32
  }
}

</mosaic_0001>

<llo_original>
// kernel: basic_resblock_forward.1
$region0: #{basic_resblock_forward.1}
  #allocation0 [shape = 'u32[]', space=smem, size = 0x4, offset = 0x4, fixed_abs, tag = 'smem constant byte address 0x4 - core index']
  #allocation1 [shape = 'u32[144,128]{1,0:T(1,128)}', space=vmem, size = 0x12000, scoped, tag = 'internal scratch']
  #allocation2 [shape = 'f32[18,128]{1,0:T(8,128)}', space=vmem, size = 0x3000, scoped, tag = 'scratch operand']
  %s0 = inlined_call_operand.vmem [shape: bf16[2,16,192], index: 0, kind: input, shape index: {}]
  %s1 = inlined_call_operand.vmem [shape: bf16[192,128], index: 1, kind: input, shape index: {}]
  %s2 = inlined_call_operand.vmem [shape: f32[1,128], index: 2, kind: input, shape index: {}]
  %s3 = inlined_call_operand.vmem [shape: bf16[384,128], index: 3, kind: input, shape index: {}]
  %s4 = inlined_call_operand.vmem [shape: f32[1,128], index: 4, kind: input, shape index: {}]
  %s5 = inlined_call_operand.vmem [shape: f32[2,16,128], index: 5, kind: output, shape index: {}]
  %s6 = sld [smem:[#allocation0]]
  $region53: #{basic_resblock_forward.1} parent=0
    _
  %s8 = ssub.s32 1, %s6
  %s9 = scalar_select 0, %s8, %s6
  loop: start=0, step=1, limit=4
  $region2: #{basic_resblock_forward.1} parent=0 // loop_pre_header
    _
  $region3: #{basic_resblock_forward.1} parent=0 // loop_header
    %s11 = sphi 0, %s15
    %p12 = scmp.ge.s32.totalorder %s11, 4
    %s21 = sphi 0, %s23
    %s24 = sphi 0, %s21
    %s25 = sphi 0, %s24
    %s41 = sphi 0, %s25
    %s45 = sphi 0, %s45
    %s47 = sphi 0, %s45
    %s48 = sphi 0, %s47
    %s62 = sphi 0, %s48
    %s66 = sphi 0, %s66
    %s68 = sphi 0, %s66
    %s69 = sphi 0, %s68
    %s83 = sphi 0, %s69
    %s87 = sphi 0, %s87
    %s89 = sphi 0, %s87
    %s90 = sphi 0, %s89
    %s104 = sphi 0, %s90
    %s108 = sphi 0, %s108
    %s110 = sphi 0, %s108
    %s111 = sphi 0, %s110
    %s125 = sphi 0, %s111
    %s131 = sphi 0, %s133
    %s134 = sphi 0, %s131
    %s135 = sphi 0, %s134
    %s151 = sphi 0, %s135
  $region4: #{basic_resblock_forward.1} parent=0 // loop_header_branch
    %14 = sbr.rel (%p12) target = $region8
  $region5: #{basic_resblock_forward.1} parent=0 // loop_body
    %s16 = ssub.s32 %s11, 1
    %s17 = ssub.s32 %s11, 2
    %s18 = sadd.s32 %s11, 1
    %s19 = ssub.s32 %s11, %s18
    %p20 = scmp.eq.s32.totalorder %s19, 0
    %s22 = sadd.s32 %s21, 1
    %s23 = scalar_select %p20, %s21, %s22
    %p26 = pneg %p20
    %p27 = scmp.eq.s32.totalorder %s11, 1
    %p28 = por %p26, %p27
    %p29 = scmp.ne.s32.totalorder %s21, %s24
    %p30 = scmp.eq.s32.totalorder %s11, 0
    %p31 = por %p29, %p30
    %p32 = scmp.ne.s32.totalorder %s21, %s24
    %p33 = scmp.eq.s32.totalorder %s16, 1
    %p34 = por %p32, %p33
    %p35 = scmp.ne.s32.totalorder %s24, %s25
    %p36 = scmp.eq.s32.totalorder %s16, 0
    %p37 = por %p35, %p36
    %p38 = scmp.ne.s32.totalorder %s24, %s25
    %p39 = scmp.eq.s32.totalorder %s17, 1
    %p40 = por %p38, %p39
    %p42 = scmp.ne.s32.totalorder %s25, %s41
    %p43 = scmp.eq.s32.totalorder %s17, 0
    %p44 = por %p42, %p43
    %s46 = sadd.s32 %s45, 1
    %p49 = scmp.eq.s32.totalorder %s11, 1
    %p50 = scmp.ne.s32.totalorder %s45, %s47
    %p51 = scmp.eq.s32.totalorder %s11, 0
    %p52 = por %p50, %p51
    %p53 = scmp.ne.s32.totalorder %s45, %s47
    %p54 = scmp.eq.s32.totalorder %s16, 1
    %p55 = por %p53, %p54
    %p56 = scmp.ne.s32.totalorder %s47, %s48
    %p57 = scmp.eq.s32.totalorder %s16, 0
    %p58 = por %p56, %p57
    %p59 = scmp.ne.s32.totalorder %s47, %s48
    %p60 = scmp.eq.s32.totalorder %s17, 1
    %p61 = por %p59, %p60
    %p63 = scmp.ne.s32.totalorder %s48, %s62
    %p64 = scmp.eq.s32.totalorder %s17, 0
    %p65 = por %p63, %p64
    %s67 = sadd.s32 %s66, 1
    %p70 = scmp.eq.s32.totalorder %s11, 1
    %p71 = scmp.ne.s32.totalorder %s66, %s68
    %p72 = scmp.eq.s32.totalorder %s11, 0
    %p73 = por %p71, %p72
    %p74 = scmp.ne.s32.totalorder %s66, %s68
    %p75 = scmp.eq.s32.totalorder %s16, 1
    %p76 = por %p74, %p75
    %p77 = scmp.ne.s32.totalorder %s68, %s69
    %p78 = scmp.eq.s32.totalorder %s16, 0
    %p79 = por %p77, %p78
    %p80 = scmp.ne.s32.totalorder %s68, %s69
    %p81 = scmp.eq.s32.totalorder %s17, 1
    %p82 = por %p80, %p81
    %p84 = scmp.ne.s32.totalorder %s69, %s83
    %p85 = scmp.eq.s32.totalorder %s17, 0
    %p86 = por %p84, %p85
    %s88 = sadd.s32 %s87, 1
    %p91 = scmp.eq.s32.totalorder %s11, 1
    %p92 = scmp.ne.s32.totalorder %s87, %s89
    %p93 = scmp.eq.s32.totalorder %s11, 0
    %p94 = por %p92, %p93
    %p95 = scmp.ne.s32.totalorder %s87, %s89
    %p96 = scmp.eq.s32.totalorder %s16, 1
    %p97 = por %p95, %p96
    %p98 = scmp.ne.s32.totalorder %s89, %s90
    %p99 = scmp.eq.s32.totalorder %s16, 0
    %p100 = por %p98, %p99
    %p101 = scmp.ne.s32.totalorder %s89, %s90
    %p102 = scmp.eq.s32.totalorder %s17, 1
    %p103 = por %p101, %p102
    %p105 = scmp.ne.s32.totalorder %s90, %s104
    %p106 = scmp.eq.s32.totalorder %s17, 0
    %p107 = por %p105, %p106
    %s109 = sadd.s32 %s108, 1
    %p112 = scmp.eq.s32.totalorder %s11, 1
    %p113 = scmp.ne.s32.totalorder %s108, %s110
    %p114 = scmp.eq.s32.totalorder %s11, 0
    %p115 = por %p113, %p114
    %p116 = scmp.ne.s32.totalorder %s108, %s110
    %p117 = scmp.eq.s32.totalorder %s16, 1
    %p118 = por %p116, %p117
    %p119 = scmp.ne.s32.totalorder %s110, %s111
    %p120 = scmp.eq.s32.totalorder %s16, 0
    %p121 = por %p119, %p120
    %p122 = scmp.ne.s32.totalorder %s110, %s111
    %p123 = scmp.eq.s32.totalorder %s17, 1
    %p124 = por %p122, %p123
    %p126 = scmp.ne.s32.totalorder %s111, %s125
    %p127 = scmp.eq.s32.totalorder %s17, 0
    %p128 = por %p126, %p127
    %s129 = ssub.s32 %s11, %s18
    %p130 = scmp.eq.s32.totalorder %s129, 0
    %s132 = sadd.s32 %s131, 1
    %s133 = scalar_select %p130, %s131, %s132
    %p136 = pneg %p130
    %p137 = scmp.eq.s32.totalorder %s11, 1
    %p138 = por %p136, %p137
    %p139 = scmp.ne.s32.totalorder %s131, %s134
    %p140 = scmp.eq.s32.totalorder %s11, 0
    %p141 = por %p139, %p140
    %p142 = scmp.ne.s32.totalorder %s131, %s134
    %p143 = scmp.eq.s32.totalorder %s16, 1
    %p144 = por %p142, %p143
    %p145 = scmp.ne.s32.totalorder %s134, %s135
    %p146 = scmp.eq.s32.totalorder %s16, 0
    %p147 = por %p145, %p146
    %p148 = scmp.ne.s32.totalorder %s134, %s135
    %p149 = scmp.eq.s32.totalorder %s17, 1
    %p150 = por %p148, %p149
    %p152 = scmp.ne.s32.totalorder %s135, %s151
    %p153 = scmp.eq.s32.totalorder %s17, 0
    %p154 = por %p152, %p153
    %p155 = scmp.le.s32.totalorder 1, %s11
    %p156 = scmp.lt.s32.totalorder %s11, 3
    %p157 = pnand %p155, %p156
    %p158 = pneg %p157
    // Predicated region
    $region9: #{basic_resblock_forward.1} parent=5 // pred_check
      _
    $region10: #{basic_resblock_forward.1} parent=5 // pred_check_branch
      %160 = sbr.rel (%p157) target = $region12
    $region11: #{basic_resblock_forward.1} parent=5 // pred_region
      %s161 = ssub.s32 %s11, 1
      // Predicated region
      $region13: #{basic_resblock_forward.1} parent=11 // pred_check
        %p162 = pneg %p58
      $region14: #{basic_resblock_forward.1} parent=11 // pred_check_branch
        %164 = sbr.rel (%p162) target = $region16
      $region15: #{basic_resblock_forward.1} parent=11 // pred_region
        _
      $region16: #{basic_resblock_forward.1} parent=11 // pred_fallthru
        _
      // Predicated region
      $region17: #{basic_resblock_forward.1} parent=11 // pred_check
        %p165 = pneg %p79
      $region18: #{basic_resblock_forward.1} parent=11 // pred_check_branch
        %167 = sbr.rel (%p165) target = $region20
      $region19: #{basic_resblock_forward.1} parent=11 // pred_region
        _
      $region20: #{basic_resblock_forward.1} parent=11 // pred_fallthru
        _
      // Predicated region
      $region21: #{basic_resblock_forward.1} parent=11 // pred_check
        %p168 = pneg %p100
      $region22: #{basic_resblock_forward.1} parent=11 // pred_check_branch
        %170 = sbr.rel (%p168) target = $region24
      $region23: #{basic_resblock_forward.1} parent=11 // pred_region
        _
      $region24: #{basic_resblock_forward.1} parent=11 // pred_fallthru
        _
      // Predicated region
      $region25: #{basic_resblock_forward.1} parent=11 // pred_check
        %p171 = pneg %p121
      $region26: #{basic_resblock_forward.1} parent=11 // pred_check_branch
        %173 = sbr.rel (%p171) target = $region28
      $region27: #{basic_resblock_forward.1} parent=11 // pred_region
        _
      $region28: #{basic_resblock_forward.1} parent=11 // pred_fallthru
        _
    $region12: #{basic_resblock_forward.1} parent=5 // pred_fallthru
      _
    %p174 = scmp.lt.s32.totalorder %s11, 2
    // Predicated region
    $region29: #{basic_resblock_forward.1} parent=5 // pred_check
      %p175 = pneg %p174
    $region30: #{basic_resblock_forward.1} parent=5 // pred_check_branch
      %177 = sbr.rel (%p175) target = $region32
    $region31: #{basic_resblock_forward.1} parent=5 // pred_region
      // Predicated region
      $region33: #{basic_resblock_forward.1} parent=31 // pred_check
        %p178 = pneg %p31
      $region34: #{basic_resblock_forward.1} parent=31 // pred_check_branch
        %180 = sbr.rel (%p178) target = $region36
      $region35: #{basic_resblock_forward.1} parent=31 // pred_region
        %p181 = scmp.lt.s32.totalorder %s11, 1
        %s182 = scalar_select %p181, %s11, 1
        %s183 = smul.addr %s182, 4
        %s184 = smul.addr %s183, 4
        %s185 = scalar_lea.vmem %s0, %s184
      $region36: #{basic_resblock_forward.1} parent=31 // pred_fallthru
        _
    $region32: #{basic_resblock_forward.1} parent=5 // pred_fallthru
      _
    %p186 = scmp.le.s32.totalorder 1, %s11
    %p187 = scmp.lt.s32.totalorder %s11, 3
    %p188 = pnand %p186, %p187
    %p189 = pneg %p188
    // Predicated region
    $region37: #{basic_resblock_forward.1} parent=5 // pred_check
      _
    $region38: #{basic_resblock_forward.1} parent=5 // pred_check_branch
      %191 = sbr.rel (%p188) target = $region40
    $region39: #{basic_resblock_forward.1} parent=5 // pred_region
      %s192 = ssub.s32 %s11, 1
      %p193 = scmp.lt.s32.totalorder %s16, 1
      %s194 = scalar_select %p193, %s16, 1
      %s195 = smul.addr %s194, 4
      %s196 = smul.addr %s195, 4
      %s197 = scalar_lea.vmem %s0, %s196
      %p198 = pneg %p37
      %p199 = pneg %p34
      %p200 = pneg %p58
      %p201 = pneg %p55
      %p202 = pneg %p79
      %p203 = pneg %p76
      %p204 = pneg %p100
      %p205 = pneg %p97
      %p206 = pneg %p121
      %p207 = pneg %p118
      %p208 = pneg %p147
      %p209 = pneg %p144
      %p210 = scmp.lt.s32.totalorder %s16, 1
      %s211 = scalar_select %p210, %s16, 1
      %s212 = smul.addr %s211, 2
      %s213 = smul.addr %s212, 8
      %s214 = scalar_lea.vmem %s5, %s213
      %p215 = scmp.lt.s32.totalorder %s16, 1
      %s216 = scalar_select %p215, %s16, 1
      %s217 = smul.addr %s216, 4
      %s218 = smul.addr %s217, 4
      %s219 = scalar_lea.vmem %s0, %s218
      %p220 = scmp.lt.s32.totalorder %s16, 1
      %s221 = scalar_select %p220, %s16, 1
      %s222 = smul.addr %s221, 2
      %s223 = smul.addr %s222, 8
      %s224 = scalar_lea.vmem %s5, %s223
      %v226 = vld [vmem:[%s219] sm:$0xff]
      %v227 = vld [vmem:[%s219 + $0x8] sm:$0xff]
      %v228 = vld [vmem:[%s1] sm:$0xf]
      %v229 = vld [vmem:[%s1 + $0x4] sm:$0xf]
      %v230 = vld [vmem:[%s1 + $0x8] sm:$0xf]
      %v231 = vld [vmem:[%s1 + $0xc] sm:$0xf]
      %v232 = vld [vmem:[%s1 + $0x10] sm:$0xf]
      %v233 = vld [vmem:[%s1 + $0x14] sm:$0xf]
      %v234 = vld [vmem:[%s1 + $0x18] sm:$0xf]
      %v235 = vld [vmem:[%s1 + $0x1c] sm:$0xf]
      %v236 = vld [vmem:[%s1 + $0x20] sm:$0xf]
      %v237 = vld [vmem:[%s1 + $0x24] sm:$0xf]
      %v238 = vld [vmem:[%s1 + $0x28] sm:$0xf]
      %v239 = vld [vmem:[%s1 + $0x2c] sm:$0xf]
      %v240 = vld [vmem:[%s1 + $0x30] sm:$0xf]
      %v241 = vld [vmem:[%s1 + $0x34] sm:$0xf]
      %v242 = vld [vmem:[%s1 + $0x38] sm:$0xf]
      %v243 = vld [vmem:[%s1 + $0x3c] sm:$0xf]
      %v244 = vld [vmem:[%s1 + $0x40] sm:$0xf]
      %v245 = vld [vmem:[%s1 + $0x44] sm:$0xf]
      %v246 = vld [vmem:[%s1 + $0x48] sm:$0xf]
      %v247 = vld [vmem:[%s1 + $0x4c] sm:$0xf]
      %v248 = vld [vmem:[%s1 + $0x50] sm:$0xf]
      %v249 = vld [vmem:[%s1 + $0x54] sm:$0xf]
      %v250 = vld [vmem:[%s1 + $0x58] sm:$0xf]
      %v251 = vld [vmem:[%s1 + $0x5c] sm:$0xf]
      %v252 = vld [vmem:[%s2] sm:$0x1]
      %v254 = vlaneseq
      %v255 = vshrl.u32 %v254, 7
      %v256 = vsub.s32 0, %v255
      %v257 = vrot.slane %v252, %v256
      %v261 = vunpack.c.l.b16 %v226
      %v262 = vunpack.c.h.b16 %v226
      %v263 = vunpack.c.l.b16 %v227
      %v264 = vunpack.c.h.b16 %v227
      %v265 = vpack.c.b16 %v263, %v261
      %v266 = vpack.c.b16 %v264, %v262
      %v292 = vunpack.c.l.b16 %v228
      %v293 = vunpack.c.l.b16 %v229
      %v294 = vunpack.c.l.b16 %v230
      %v295 = vunpack.c.l.b16 %v231
      %v296 = vunpack.c.l.b16 %v232
      %v297 = vunpack.c.l.b16 %v233
      %v298 = vunpack.c.l.b16 %v234
      %v299 = vunpack.c.l.b16 %v235
      %v300 = vunpack.c.l.b16 %v236
      %v301 = vunpack.c.l.b16 %v237
      %v302 = vunpack.c.l.b16 %v238
      %v303 = vunpack.c.l.b16 %v239
      %v304 = vunpack.c.l.b16 %v240
      %v305 = vunpack.c.l.b16 %v241
      %v306 = vunpack.c.l.b16 %v242
      %v307 = vunpack.c.l.b16 %v243
      %v308 = vunpack.c.l.b16 %v244
      %v309 = vunpack.c.l.b16 %v245
      %v310 = vunpack.c.l.b16 %v246
      %v311 = vunpack.c.l.b16 %v247
      %v312 = vunpack.c.l.b16 %v248
      %v313 = vunpack.c.l.b16 %v249
      %v314 = vunpack.c.l.b16 %v250
      %v315 = vunpack.c.l.b16 %v251
      %v316 = vpack.c.b16 %v293, %v292
      %v317 = vpack.c.b16 %v295, %v294
      %v318 = vpack.c.b16 %v297, %v296
      %v319 = vpack.c.b16 %v299, %v298
      %v320 = vpack.c.b16 %v301, %v300
      %v321 = vpack.c.b16 %v303, %v302
      %v322 = vpack.c.b16 %v305, %v304
      %v323 = vpack.c.b16 %v307, %v306
      %v324 = vpack.c.b16 %v309, %v308
      %v325 = vpack.c.b16 %v311, %v310
      %v326 = vpack.c.b16 %v313, %v312
      %v327 = vpack.c.b16 %v315, %v314
      %vm340 = vcmask 523264
      %v342 = vsel %vm340, %v266, 0
      %344 = vmatprep.subr.bf16.mxu0 0
      %345 = vmatpush1.bf16.msra.mxu0 %v316
      %346 = vmatprep.subr.bf16.mxu0 0
      %347 = vmatpush1.bf16.msra.mxu0 %v317
      %348 = vmatprep.subr.bf16.mxu0 0
      %349 = vmatpush1.bf16.msra.mxu0 %v318
      %350 = vmatprep.subr.bf16.mxu0 0
      %351 = vmatpush1.bf16.msra.mxu0 %v319
      %352 = vmatprep.subr.bf16.mxu0 0
      %353 = vmatpush1.bf16.msra.mxu0 %v320
      %354 = vmatprep.subr.bf16.mxu0 0
      %355 = vmatpush1.bf16.msra.mxu0 %v321
      %356 = vmatprep.subr.bf16.mxu0 0
      %357 = vmatpush1.bf16.msra.mxu0 %v322
      %358 = vmatprep.subr.bf16.mxu0 0
      %359 = vmatpush1.bf16.msra.mxu0 %v323
      %360 = vmatprep.subr.bf16.mxu0 0
      %361 = vmatpush1.bf16.msra.mxu0 %v324
      %362 = vmatprep.subr.bf16.mxu0 0
      %363 = vmatpush1.bf16.msra.mxu0 %v325
      %364 = vmatprep.subr.bf16.mxu0 0
      %365 = vmatpush1.bf16.msra.mxu0 %v326
      %366 = vmatprep.subr.bf16.mxu0 0
      %367 = vmatpush1.bf16.msra.mxu0 %v327
      %368 = vmatprep.subr.bf16.mxu0 0
      %369 = vmatpush1.bf16.msra.mxu0 0
      %370 = vmatprep.subr.bf16.mxu0 0
      %371 = vmatpush1.bf16.msra.mxu0 0
      %372 = vmatprep.subr.bf16.mxu0 0
      %373 = vmatpush1.bf16.msra.mxu0 0
      %374 = vmatprep.subr.bf16.mxu0 0
      %375 = vmatpush1.bf16.msra.mxu0 0
      %376 = vmatprep.mubr.bf16.mxu0 %v342
      %377 = vmatmul.mubr.bf16.gmra.mrb[0].mxu0 %v265
      %v378 = vpop.f32.mrb[0].mxu0
      %v379 = vadd.f32 %v257, %v378
      %v380 = vpop.f32.mrb[0].mxu0
      %v381 = vpop.f32.mrb[0].mxu0
      %v382 = vadd.f32 %v257, %v381
      %v383 = vpop.f32.mrb[0].mxu0
      %384 = vdwg.mxu0
      %v385 = vmax.f32 %v379, 0.0
      %v386 = vmax.f32 %v382, 0.0
      %387 = vst [vmem:[#allocation2] sm:$0x1] 0.0
      %388 = vst [vmem:[#allocation2 + $0x11] sm:$0x1] 0.0
      %389 = vst [vmem:[#allocation2 + $0x1] sm:$0xff] %v385
      %390 = vst [vmem:[#allocation2 + $0x9] sm:$0xff] %v386
      %v391 = vld [vmem:[#allocation2] sm:$0xff]
      %v392 = vld [vmem:[#allocation2 + $0x8] sm:$0xff]
      %v393 = vld [vmem:[#allocation2 + $0x1] sm:$0xff]
      %v394 = vld [vmem:[#allocation2 + $0x9] sm:$0xff]
      %v395 = vld [vmem:[#allocation2 + $0x2] sm:$0xff]
      %v396 = vld [vmem:[#allocation2 + $0xa] sm:$0xff]
      %v397 = vpack.c.bf16 %v392, %v391
      %v398 = vpack.c.bf16 %v394, %v393
      %v399 = vpack.c.bf16 %v396, %v395
      %v400 = vld [vmem:[%s3] sm:$0xf]
      %v401 = vld [vmem:[%s3 + $0x4] sm:$0xf]
      %v402 = vld [vmem:[%s3 + $0x8] sm:$0xf]
      %v403 = vld [vmem:[%s3 + $0xc] sm:$0xf]
      %v404 = vld [vmem:[%s3 + $0x10] sm:$0xf]
      %v405 = vld [vmem:[%s3 + $0x14] sm:$0xf]
      %v406 = vld [vmem:[%s3 + $0x18] sm:$0xf]
      %v407 = vld [vmem:[%s3 + $0x1c] sm:$0xf]
      %v408 = vld [vmem:[%s3 + $0x20] sm:$0xf]
      %v409 = vld [vmem:[%s3 + $0x24] sm:$0xf]
      %v410 = vld [vmem:[%s3 + $0x28] sm:$0xf]
      %v411 = vld [vmem:[%s3 + $0x2c] sm:$0xf]
      %v412 = vld [vmem:[%s3 + $0x30] sm:$0xf]
      %v413 = vld [vmem:[%s3 + $0x34] sm:$0xf]
      %v414 = vld [vmem:[%s3 + $0x38] sm:$0xf]
      %v415 = vld [vmem:[%s3 + $0x3c] sm:$0xf]
      %v416 = vld [vmem:[%s3 + $0x40] sm:$0xf]
      %v417 = vld [vmem:[%s3 + $0x44] sm:$0xf]
      %v418 = vld [vmem:[%s3 + $0x48] sm:$0xf]
      %v419 = vld [vmem:[%s3 + $0x4c] sm:$0xf]
      %v420 = vld [vmem:[%s3 + $0x50] sm:$0xf]
      %v421 = vld [vmem:[%s3 + $0x54] sm:$0xf]
      %v422 = vld [vmem:[%s3 + $0x58] sm:$0xf]
      %v423 = vld [vmem:[%s3 + $0x5c] sm:$0xf]
      %v424 = vld [vmem:[%s3 + $0x60] sm:$0xf]
      %v425 = vld [vmem:[%s3 + $0x64] sm:$0xf]
      %v426 = vld [vmem:[%s3 + $0x68] sm:$0xf]
      %v427 = vld [vmem:[%s3 + $0x6c] sm:$0xf]
      %v428 = vld [vmem:[%s3 + $0x70] sm:$0xf]
      %v429 = vld [vmem:[%s3 + $0x74] sm:$0xf]
      %v430 = vld [vmem:[%s3 + $0x78] sm:$0xf]
      %v431 = vld [vmem:[%s3 + $0x7c] sm:$0xf]
      %v432 = vld [vmem:[%s3 + $0x80] sm:$0xf]
      %v433 = vld [vmem:[%s3 + $0x84] sm:$0xf]
      %v434 = vld [vmem:[%s3 + $0x88] sm:$0xf]
      %v435 = vld [vmem:[%s3 + $0x8c] sm:$0xf]
      %v436 = vld [vmem:[%s3 + $0x90] sm:$0xf]
      %v437 = vld [vmem:[%s3 + $0x94] sm:$0xf]
      %v438 = vld [vmem:[%s3 + $0x98] sm:$0xf]
      %v439 = vld [vmem:[%s3 + $0x9c] sm:$0xf]
      %v440 = vld [vmem:[%s3 + $0xa0] sm:$0xf]
      %v441 = vld [vmem:[%s3 + $0xa4] sm:$0xf]
      %v442 = vld [vmem:[%s3 + $0xa8] sm:$0xf]
      %v443 = vld [vmem:[%s3 + $0xac] sm:$0xf]
      %v444 = vld [vmem:[%s3 + $0xb0] sm:$0xf]
      %v445 = vld [vmem:[%s3 + $0xb4] sm:$0xf]
      %v446 = vld [vmem:[%s3 + $0xb8] sm:$0xf]
      %v447 = vld [vmem:[%s3 + $0xbc] sm:$0xf]
      %v448 = vld [vmem:[%s4] sm:$0x1]
      %v450 = vlaneseq
      %v451 = vshrl.u32 %v450, 7
      %v452 = vsub.s32 0, %v451
      %v453 = vrot.slane %v448, %v452
      %v503 = vunpack.c.l.b16 %v400
      %v504 = vunpack.c.l.b16 %v401
      %v505 = vunpack.c.l.b16 %v402
      %v506 = vunpack.c.l.b16 %v403
      %v507 = vunpack.c.l.b16 %v404
      %v508 = vunpack.c.l.b16 %v405
      %v509 = vunpack.c.l.b16 %v406
      %v510 = vunpack.c.l.b16 %v407
      %v511 = vunpack.c.l.b16 %v408
      %v512 = vunpack.c.l.b16 %v409
      %v513 = vunpack.c.l.b16 %v410
      %v514 = vunpack.c.l.b16 %v411
      %v515 = vunpack.c.l.b16 %v412
      %v516 = vunpack.c.l.b16 %v413
      %v517 = vunpack.c.l.b16 %v414
      %v518 = vunpack.c.l.b16 %v415
      %v519 = vunpack.c.l.b16 %v416
      %v520 = vunpack.c.l.b16 %v417
      %v521 = vunpack.c.l.b16 %v418
      %v522 = vunpack.c.l.b16 %v419
      %v523 = vunpack.c.l.b16 %v420
      %v524 = vunpack.c.l.b16 %v421
      %v525 = vunpack.c.l.b16 %v422
      %v526 = vunpack.c.l.b16 %v423
      %v527 = vunpack.c.l.b16 %v424
      %v528 = vunpack.c.l.b16 %v425
      %v529 = vunpack.c.l.b16 %v426
      %v530 = vunpack.c.l.b16 %v427
      %v531 = vunpack.c.l.b16 %v428
      %v532 = vunpack.c.l.b16 %v429
      %v533 = vunpack.c.l.b16 %v430
      %v534 = vunpack.c.l.b16 %v431
      %v535 = vunpack.c.l.b16 %v432
      %v536 = vunpack.c.l.b16 %v433
      %v537 = vunpack.c.l.b16 %v434
      %v538 = vunpack.c.l.b16 %v435
      %v539 = vunpack.c.l.b16 %v436
      %v540 = vunpack.c.l.b16 %v437
      %v541 = vunpack.c.l.b16 %v438
      %v542 = vunpack.c.l.b16 %v439
      %v543 = vunpack.c.l.b16 %v440
      %v544 = vunpack.c.l.b16 %v441
      %v545 = vunpack.c.l.b16 %v442
      %v546 = vunpack.c.l.b16 %v443
      %v547 = vunpack.c.l.b16 %v444
      %v548 = vunpack.c.l.b16 %v445
      %v549 = vunpack.c.l.b16 %v446
      %v550 = vunpack.c.l.b16 %v447
      %v551 = vpack.c.b16 %v504, %v503
      %v552 = vpack.c.b16 %v506, %v505
      %v553 = vpack.c.b16 %v508, %v507
      %v554 = vpack.c.b16 %v510, %v509
      %v555 = vpack.c.b16 %v512, %v511
      %v556 = vpack.c.b16 %v514, %v513
      %v557 = vpack.c.b16 %v516, %v515
      %v558 = vpack.c.b16 %v518, %v517
      %v559 = vpack.c.b16 %v520, %v519
      %v560 = vpack.c.b16 %v522, %v521
      %v561 = vpack.c.b16 %v524, %v523
      %v562 = vpack.c.b16 %v526, %v525
      %v563 = vpack.c.b16 %v528, %v527
      %v564 = vpack.c.b16 %v530, %v529
      %v565 = vpack.c.b16 %v532, %v531
      %v566 = vpack.c.b16 %v534, %v533
      %v567 = vpack.c.b16 %v536, %v535
      %v568 = vpack.c.b16 %v538, %v537
      %v569 = vpack.c.b16 %v540, %v539
      %v570 = vpack.c.b16 %v542, %v541
      %v571 = vpack.c.b16 %v544, %v543
      %v572 = vpack.c.b16 %v546, %v545
      %v573 = vpack.c.b16 %v548, %v547
      %v574 = vpack.c.b16 %v550, %v549
      %599 = vmatprep.subr.bf16.mxu0 0
      %600 = vmatpush1.bf16.msra.mxu0 %v551
      %601 = vmatprep.subr.bf16.mxu0 0
      %602 = vmatpush1.bf16.msra.mxu0 %v552
      %603 = vmatprep.subr.bf16.mxu0 0
      %604 = vmatpush1.bf16.msra.mxu0 %v553
      %605 = vmatprep.subr.bf16.mxu0 0
      %606 = vmatpush1.bf16.msra.mxu0 %v554
      %607 = vmatprep.subr.bf16.mxu0 0
      %608 = vmatpush1.bf16.msra.mxu0 %v555
      %609 = vmatprep.subr.bf16.mxu0 0
      %610 = vmatpush1.bf16.msra.mxu0 %v556
      %611 = vmatprep.subr.bf16.mxu0 0
      %612 = vmatpush1.bf16.msra.mxu0 %v557
      %613 = vmatprep.subr.bf16.mxu0 0
      %614 = vmatpush1.bf16.msra.mxu0 %v558
      %615 = vmatprep.subr.bf16.mxu0 0
      %616 = vmatpush1.bf16.msra.mxu0 %v559
      %617 = vmatprep.subr.bf16.mxu0 0
      %618 = vmatpush1.bf16.msra.mxu0 %v560
      %619 = vmatprep.subr.bf16.mxu0 0
      %620 = vmatpush1.bf16.msra.mxu0 %v561
      %621 = vmatprep.subr.bf16.mxu0 0
      %622 = vmatpush1.bf16.msra.mxu0 %v562
      %623 = vmatprep.subr.bf16.mxu0 0
      %624 = vmatpush1.bf16.msra.mxu0 %v563
      %625 = vmatprep.subr.bf16.mxu0 0
      %626 = vmatpush1.bf16.msra.mxu0 %v564
      %627 = vmatprep.subr.bf16.mxu0 0
      %628 = vmatpush1.bf16.msra.mxu0 %v565
      %629 = vmatprep.subr.bf16.mxu0 0
      %630 = vmatpush1.bf16.msra.mxu0 %v566
      %631 = vmatprep.mubr.bf16.mxu0 %v398
      %632 = vmatmul.mubr.bf16.gmra.mrb[0].mxu0 %v397
      %v633 = vpop.f32.mrb[0].mxu0
      %v634 = vadd.f32 %v453, %v633
      %v635 = vpop.f32.mrb[0].mxu0
      %v636 = vpop.f32.mrb[0].mxu0
      %v637 = vadd.f32 %v453, %v636
      %v638 = vpop.f32.mrb[0].mxu0
      %639 = vdwg.mxu0
      %640 = vmatprep.subr.bf16.mxu0 0
      %641 = vmatpush1.bf16.msra.mxu0 %v567
      %642 = vmatprep.subr.bf16.mxu0 0
      %643 = vmatpush1.bf16.msra.mxu0 %v568
      %644 = vmatprep.subr.bf16.mxu0 0
      %645 = vmatpush1.bf16.msra.mxu0 %v569
      %646 = vmatprep.subr.bf16.mxu0 0
      %647 = vmatpush1.bf16.msra.mxu0 %v570
      %648 = vmatprep.subr.bf16.mxu0 0
      %649 = vmatpush1.bf16.msra.mxu0 %v571
      %650 = vmatprep.subr.bf16.mxu0 0
      %651 = vmatpush1.bf16.msra.mxu0 %v572
      %652 = vmatprep.subr.bf16.mxu0 0
      %653 = vmatpush1.bf16.msra.mxu0 %v573
      %654 = vmatprep.subr.bf16.mxu0 0
      %655 = vmatpush1.bf16.msra.mxu0 %v574
      %656 = vmatprep.subr.bf16.mxu0 0
      %657 = vmatpush1.bf16.msra.mxu0 0
      %658 = vmatprep.subr.bf16.mxu0 0
      %659 = vmatpush1.bf16.msra.mxu0 0
      %660 = vmatprep.subr.bf16.mxu0 0
      %661 = vmatpush1.bf16.msra.mxu0 0
      %662 = vmatprep.subr.bf16.mxu0 0
      %663 = vmatpush1.bf16.msra.mxu0 0
      %664 = vmatprep.subr.bf16.mxu0 0
      %665 = vmatpush1.bf16.msra.mxu0 0
      %666 = vmatprep.subr.bf16.mxu0 0
      %667 = vmatpush1.bf16.msra.mxu0 0
      %668 = vmatprep.subr.bf16.mxu0 0
      %669 = vmatpush1.bf16.msra.mxu0 0
      %670 = vmatprep.subr.bf16.mxu0 0
      %671 = vmatpush1.bf16.msra.mxu0 0
      %672 = vmatprep.mubr.bf16.mxu0 0
      %673 = vmatmul.mubr.bf16.gmra.mrb[0].mxu0 %v399
      %v674 = vpop.f32.mrb[0].mxu0
      %v675 = vadd.f32 %v634, %v674
      %v676 = vpop.f32.mrb[0].mxu0
      %v677 = vpop.f32.mrb[0].mxu0
      %v678 = vadd.f32 %v637, %v677
      %v679 = vpop.f32.mrb[0].mxu0
      %680 = vdwg.mxu0
      %v681 = vadd.f32 %v675, %v379
      %v682 = vadd.f32 %v678, %v382
      %v683 = vmax.f32 %v681, 0.0
      %v684 = vmax.f32 %v682, 0.0
      %685 = vst [vmem:[%s224] sm:$0xff] %v683
      %686 = vst [vmem:[%s224 + $0x8] sm:$0xff] %v684
      %p687 = scmp.lt.s32.totalorder %s16, 1
      %s688 = scalar_select %p687, %s16, 1
      %s689 = smul.addr %s688, 2
      %s690 = smul.addr %s689, 8
      %s691 = scalar_lea.vmem %s5, %s690
      // Predicated region
      $region41: #{basic_resblock_forward.1} parent=39 // pred_check
        %p692 = pneg %p144
      $region42: #{basic_resblock_forward.1} parent=39 // pred_check_branch
        %694 = sbr.rel (%p692) target = $region44
      $region43: #{basic_resblock_forward.1} parent=39 // pred_region
        _
      $region44: #{basic_resblock_forward.1} parent=39 // pred_fallthru
        _
    $region40: #{basic_resblock_forward.1} parent=5 // pred_fallthru
      _
    %p695 = scmp.le.s32.totalorder 2, %s11
    // Predicated region
    $region45: #{basic_resblock_forward.1} parent=5 // pred_check
      %p696 = pneg %p695
    $region46: #{basic_resblock_forward.1} parent=5 // pred_check_branch
      %698 = sbr.rel (%p696) target = $region48
    $region47: #{basic_resblock_forward.1} parent=5 // pred_region
      %s699 = ssub.s32 %s11, 2
      // Predicated region
      $region49: #{basic_resblock_forward.1} parent=47 // pred_check
        %p700 = pneg %p150
      $region50: #{basic_resblock_forward.1} parent=47 // pred_check_branch
        %702 = sbr.rel (%p700) target = $region52
      $region51: #{basic_resblock_forward.1} parent=47 // pred_region
        %p703 = scmp.lt.s32.totalorder %s17, 1
        %s704 = scalar_select %p703, %s17, 1
        %s705 = smul.addr %s704, 2
        %s706 = smul.addr %s705, 8
        %s707 = scalar_lea.vmem %s5, %s706
      $region52: #{basic_resblock_forward.1} parent=47 // pred_fallthru
        _
    $region48: #{basic_resblock_forward.1} parent=5 // pred_fallthru
      _
  $region6: #{basic_resblock_forward.1} parent=0 // loop_footer
    %s15 = sadd.s32 1, %s11
  $region7: #{basic_resblock_forward.1} parent=0 // loop_footer_branch
    %10 = sbr.rel target = $region3
  $region8: #{basic_resblock_forward.1} parent=0 // loop_exit
    _

</llo_original>
